<compile_context>
chip_gen: v5e
topology: v5e:2x2
jax: 0.10.0
libtpu: 0.0.40
codegen_flags: <defaults>
</compile_context>

<pallas_src>
import jax
import jax.numpy as jnp
from jax import lax
from jax.experimental import pallas as pl
from jax.experimental.pallas import tpu as pltpu


# ----------------------------------------------------------------------------
# Kernel: fused 1x1 conv (BN scale pre-folded into weight) + bias add
# ----------------------------------------------------------------------------
def _shortcut_kernel(x_ref, w_ref, b_ref, o_ref):
    # x_ref: (Cin, T)     lane-dense spatial tile of one image (T = spatial tile)
    # w_ref: (Cout, Cin)  1x1 conv weight with BN scale folded into each row
    # b_ref: (Cout, 1)    folded bias = (conv_bias - mean) * scale + beta
    # o_ref: (Cout, T)    lane-dense output tile
    y = jnp.dot(w_ref[...], x_ref[...], preferred_element_type=jnp.float32)
    o_ref[...] = (y + b_ref[...]).astype(o_ref.dtype)


def _pick_spatial_tile(hw, n_batch):
    """Largest lane-dense (multiple-of-128) divisor of hw, capped at 2048 lanes,
    that still leaves >= 4 total grid steps when possible."""
    if hw % 128 != 0:
        return hw  # full-extent block (allowed: equals full array dim)
    cands = [t for t in range(128, min(hw, 2048) + 1, 128) if hw % t == 0]
    if not cands:
        return hw
    for t in sorted(cands, reverse=True):
        if n_batch * (hw // t) >= 4:
            return t
    return cands[0]


def shortcut_forward_nchw(x_nchw, kp, out_ch, stride=1):
    """Shortcut forward. x_nchw: (N, Cin, H, W) f32 -> (N, Cout, H', W') f32."""
    if stride != 1:
        # TODO(synk): fold this subsampling into the kernel's load instead.
        x_nchw = x_nchw[:, :, ::stride, ::stride]
    N, Cin, H, W = x_nchw.shape
    Cout = out_ch
    assert kp["w"].shape == (Cout, Cin), (
        f"kernel params built for {kp['w'].shape}, got (Cout, Cin)=({Cout},{Cin})")
    assert kp["b"].shape == (Cout, 1)

    HW = H * W
    x_slab = x_nchw.reshape(N, Cin, HW)          # free reshape (no transpose)

    T = _pick_spatial_tile(HW, N)
    grid = (N, HW // T)

    flops = 2 * N * Cout * Cin * HW + N * Cout * HW
    bytes_accessed = 4 * (N * Cin * HW + Cout * Cin + Cout + N * Cout * HW)

    out_slab = pl.pallas_call(
        _shortcut_kernel,
        out_shape=jax.ShapeDtypeStruct((N, Cout, HW), jnp.float32),
        grid=grid,
        in_specs=[
            pl.BlockSpec((None, Cin, T), lambda n, s: (n, 0, s)),
            pl.BlockSpec((Cout, Cin), lambda n, s: (0, 0)),
            pl.BlockSpec((Cout, 1), lambda n, s: (0, 0)),
        ],
        out_specs=pl.BlockSpec((None, Cout, T), lambda n, s: (n, 0, s)),
        compiler_params=pltpu.CompilerParams(
            dimension_semantics=("parallel", "parallel")),
        cost_estimate=pl.CostEstimate(
            flops=flops, transcendentals=0, bytes_accessed=bytes_accessed),
    )(x_slab, kp["w"], kp["b"])

    return out_slab.reshape(N, Cout, H, W)


# ----------------------------------------------------------------------------
# Deterministic parameter construction (torch layouts) + kernel-layout folding
# ----------------------------------------------------------------------------
def make_params(key, in_ch, out_ch):
    ks = jax.random.split(key, 6)
    p = {}
    p["w"] = 0.25 * jax.random.normal(ks[0], (out_ch, in_ch, 1, 1), jnp.float32)
    p["cb"] = 0.1 * jax.random.normal(ks[1], (out_ch,), jnp.float32)       # conv bias
    p["gamma"] = 1.0 + 0.2 * jax.random.normal(ks[2], (out_ch,), jnp.float32)
    p["beta"] = 0.1 * jax.random.normal(ks[3], (out_ch,), jnp.float32)
    p["mean"] = 0.2 * jax.random.normal(ks[4], (out_ch,), jnp.float32)
    p["var"] = 0.5 + jax.random.uniform(ks[5], (out_ch,), jnp.float32)
    return p


def to_kernel_params(p, eps=1e-5):
    """Fold eval-mode BN (scale into the weight rows, shift into the bias).
    No dependence on the spatial size anymore."""
    out_ch, in_ch = p["w"].shape[:2]
    scale = p["gamma"] / jnp.sqrt(p["var"] + eps)              # (Cout,)
    w2 = p["w"][:, :, 0, 0] * scale[:, None]                   # (Cout, Cin)
    bias = (p["cb"] - p["mean"]) * scale + p["beta"]           # (Cout,)
    return {"w": w2, "b": bias.reshape(out_ch, 1)}


# ----------------------------------------------------------------------------
# Pure-JAX (NCHW, lax.conv) reference of the PyTorch forward, for verification
# ----------------------------------------------------------------------------
def ref_forward(x, p, stride=1, eps=1e-5):
    y = lax.conv_general_dilated(x, p["w"], (stride, stride), "VALID",
                                 dimension_numbers=("NCHW", "OIHW", "NCHW"))
    y = y + p["cb"][None, :, None, None]
    s = (p["gamma"] / jnp.sqrt(p["var"] + eps))[None, :, None, None]
    return (y - p["mean"][None, :, None, None]) * s + p["beta"][None, :, None, None]


if __name__ == "__main__":
    N, H, W = 2, 16, 16
    in_ch, out_ch = 4, 8
    stride = 1

    key = jax.random.PRNGKey(0)
    kx, kpkey = jax.random.split(key)
    x_nchw = jax.random.normal(kx, (N, in_ch, H, W), jnp.float32)

    params = make_params(kpkey, in_ch, out_ch)
    kparams = to_kernel_params(params)

    out = shortcut_forward_nchw(x_nchw, kparams, out_ch, stride=stride)
    jax.block_until_ready(out)

    ref = ref_forward(x_nchw, params, stride=stride)
    err = float(jnp.max(jnp.abs(out - ref)))
    assert err < 1e-3, f"kernel/reference mismatch: max abs err = {err}"
    print("KERNEL_OK")
</pallas_src>

<mosaic_0001>
module attributes {stable_mosaic.version = 11 : i64} {
  func.func @_shortcut_kernel(%arg0: i32, %arg1: i32, %arg2: memref<1x4x128xf32, #tpu.memory_space<vmem>>, %arg3: memref<8x4xf32, #tpu.memory_space<vmem>>, %arg4: memref<8x1xf32, #tpu.memory_space<vmem>>, %arg5: memref<1x8x128xf32, #tpu.memory_space<vmem>>) attributes {dimension_semantics = [#tpu.dimension_semantics<parallel>, #tpu.dimension_semantics<parallel>], iteration_bounds = array<i64: 2, 2>, scalar_prefetch = 0 : i64, scratch_operands = 0 : i64, tpu.core_type = #tpu.core_type<tc>, window_params = [{transform_indices = @transform_0, window_bounds = array<i64: 1, 4, 128>}, {pipeline_mode = #tpu.pipeline_mode<synchronous>, transform_indices = @transform_1, window_bounds = array<i64: 8, 4>}, {pipeline_mode = #tpu.pipeline_mode<synchronous>, transform_indices = @transform_2, window_bounds = array<i64: 8, 1>}, {transform_indices = @transform_3, window_bounds = array<i64: 1, 8, 128>}]} {
    %c0 = arith.constant 0 : index
    %c0_0 = arith.constant 0 : index
    %0 = vector.load %arg3[%c0, %c0_0] : memref<8x4xf32, #tpu.memory_space<vmem>>, vector<8x4xf32>
    %c0_1 = arith.constant 0 : index
    %c0_2 = arith.constant 0 : index
    %c0_3 = arith.constant 0 : index
    %1 = vector.load %arg2[%c0_1, %c0_2, %c0_3] : memref<1x4x128xf32, #tpu.memory_space<vmem>>, vector<1x4x128xf32>
    %2 = vector.shape_cast %1 : vector<1x4x128xf32> to vector<4x128xf32>
    %cst = arith.constant dense<0.000000e+00> : vector<8x128xf32>
    %3 = tpu.matmul %0, %2, %cst {dimension_numbers = #tpu.dot_dimension_numbers<[1], [0], [0], [1], [0, 0, 1, 1], [], []>} : vector<8x4xf32>, vector<4x128xf32>, vector<8x128xf32> -> vector<8x128xf32>
    %c0_4 = arith.constant 0 : index
    %c0_5 = arith.constant 0 : index
    %4 = vector.load %arg4[%c0_4, %c0_5] : memref<8x1xf32, #tpu.memory_space<vmem>>, vector<8x1xf32>
    %5 = vector.broadcast %4 : vector<8x1xf32> to vector<8x128xf32>
    %6 = arith.addf %3, %5 : vector<8x128xf32>
    %c0_6 = arith.constant 0 : index
    %c0_7 = arith.constant 0 : index
    %c0_8 = arith.constant 0 : index
    %7 = vector.load %arg5[%c0_6, %c0_7, %c0_8] : memref<1x8x128xf32, #tpu.memory_space<vmem>>, vector<1x8x128xf32>
    %8 = vector.shape_cast %7 : vector<1x8x128xf32> to vector<8x128xf32>
    %9 = vector.shape_cast %6 : vector<8x128xf32> to vector<1x8x128xf32>
    tpu.vector_store %arg5[%c0_6, %c0_7, %c0_8], %9 {strides = array<i32>} : memref<1x8x128xf32, #tpu.memory_space<vmem>>, vector<1x8x128xf32>,
    return
  }
  func.func @transform_0(%arg0: i32, %arg1: i32) -> (i32, i32, i32) {
    %c0_i32 = arith.constant 0 : i32
    %c0_i32_0 = arith.constant 0 : i32
    return %arg0, %c0_i32, %arg1 : i32, i32, i32
  }
  func.func @transform_1(%arg0: i32, %arg1: i32) -> (i32, i32) {
    %c0_i32 = arith.constant 0 : i32
    %c0_i32_0 = arith.constant 0 : i32
    %c0_i32_1 = arith.constant 0 : i32
    return %c0_i32, %c0_i32_0 : i32, i32
  }
  func.func @transform_2(%arg0: i32, %arg1: i32) -> (i32, i32) {
    %c0_i32 = arith.constant 0 : i32
    %c0_i32_0 = arith.constant 0 : i32
    %c0_i32_1 = arith.constant 0 : i32
    return %c0_i32, %c0_i32_0 : i32, i32
  }
  func.func @transform_3(%arg0: i32, %arg1: i32) -> (i32, i32, i32) {
    %c0_i32 = arith.constant 0 : i32
    %c0_i32_0 = arith.constant 0 : i32
    return %arg0, %c0_i32, %arg1 : i32, i32, i32
  }
}

</mosaic_0001>

<llo_original>
// kernel: tpu_custom_call.1
$region0: #{tpu_custom_call.1}
  #allocation0 [shape = 'u32[]', space=smem, size = 0x4, offset = 0x4, fixed_abs, tag = 'smem constant byte address 0x4 - core index']
  #allocation1 [shape = 'u32[72,128]{1,0:T(1,128)}', space=vmem, size = 0x9000, scoped, tag = 'internal scratch']
  %s0 = inlined_call_operand.vmem [shape: f32[2,4,256], index: 0, kind: input, shape index: {}]
  %s1 = inlined_call_operand.vmem [shape: f32[8,4], index: 1, kind: input, shape index: {}]
  %s2 = inlined_call_operand.vmem [shape: f32[8,1], index: 2, kind: input, shape index: {}]
  %s3 = inlined_call_operand.hbm [shape: f32[2,8,256], index: 3, kind: output, shape index: {}]
  %s4 = sld [smem:[#allocation0]]
  $region45: #{tpu_custom_call.1} parent=0
    _
  %s6 = ssub.s32 1, %s4
  %s7 = scalar_select 0, %s6, %s4
  $region1: #{tpu_custom_call.1} parent=0
    #allocation2 [shape = 'u8[8192]{0}', space=vmem, size = 0x2000, scoped, tag = 'output window, operand 0']
    #allocation3 [shape = 's32[2]{0}', space=sflag, size = 0x8, scoped, tag = 'scoped memory for tpu_custom_call.1']
    %8 = vsyncpa [#allocation3], 0
    %s9 = scalar_lea.sflag [#allocation3], 1
    %10 = vsyncpa %s9, 0
    loop: start=0, step=1, limit=6
    $region2: #{tpu_custom_call.1} parent=1 // loop_pre_header
      _
    $region3: #{tpu_custom_call.1} parent=1 // loop_header
      %s12 = sphi 0, %s16
      %p13 = scmp.ge.s32.totalorder %s12, 6
      %s19 = sphi 0, %s31
      %s20 = sphi 0, %s27
      %s21 = sphi 0, %s19
      %s22 = sphi 0, %s20
      %s23 = sphi 0, %s21
      %s24 = sphi 0, %s22
      %s36 = sphi 0, %s38
      %s39 = sphi 0, %s36
      %s40 = sphi 0, %s39
      %s56 = sphi 0, %s40
      %s60 = sphi 0, %s60
      %s62 = sphi 0, %s60
      %s63 = sphi 0, %s62
      %s77 = sphi 0, %s63
      %s81 = sphi 0, %s81
      %s83 = sphi 0, %s81
      %s84 = sphi 0, %s83
      %s98 = sphi 0, %s84
      %s106 = sphi 0, %s108
      %s109 = sphi 0, %s106
      %s110 = sphi 0, %s109
      %s126 = sphi 0, %s110
    $region4: #{tpu_custom_call.1} parent=1 // loop_header_branch
      %15 = sbr.rel (%p13) target = $region8
    $region5: #{tpu_custom_call.1} parent=1 // loop_body
      %s17 = ssub.s32 %s12, 1
      %s18 = ssub.s32 %s12, 2
      %s25 = sadd.s32 1, %s20
      %p26 = scmp.ge.s32.totalorder %s25, 2
      %s27 = scalar_select %p26, 0, %s25
      %s28 = sadd.s32 1, %s19
      %s29 = scalar_select %p26, %s28, %s19
      %p30 = scmp.ge.s32.totalorder %s29, 2
      %s31 = scalar_select %p30, 0, %s29
      %s32 = ssub.s32 %s19, %s31
      %s33 = ssub.s32 %s20, %s27
      %s34 = sor.u32 %s32, %s33
      %p35 = scmp.eq.s32.totalorder %s34, 0
      %s37 = sadd.s32 %s36, 1
      %s38 = scalar_select %p35, %s36, %s37
      %p41 = pneg %p35
      %p42 = scmp.eq.s32.totalorder %s12, 3
      %p43 = por %p41, %p42
      %p44 = scmp.ne.s32.totalorder %s36, %s39
      %p45 = scmp.eq.s32.totalorder %s12, 0
      %p46 = por %p44, %p45
      %p47 = scmp.ne.s32.totalorder %s36, %s39
      %p48 = scmp.eq.s32.totalorder %s17, 3
      %p49 = por %p47, %p48
      %p50 = scmp.ne.s32.totalorder %s39, %s40
      %p51 = scmp.eq.s32.totalorder %s17, 0
      %p52 = por %p50, %p51
      %p53 = scmp.ne.s32.totalorder %s39, %s40
      %p54 = scmp.eq.s32.totalorder %s18, 3
      %p55 = por %p53, %p54
      %p57 = scmp.ne.s32.totalorder %s40, %s56
      %p58 = scmp.eq.s32.totalorder %s18, 0
      %p59 = por %p57, %p58
      %s61 = sadd.s32 %s60, 1
      %p64 = scmp.eq.s32.totalorder %s12, 3
      %p65 = scmp.ne.s32.totalorder %s60, %s62
      %p66 = scmp.eq.s32.totalorder %s12, 0
      %p67 = por %p65, %p66
      %p68 = scmp.ne.s32.totalorder %s60, %s62
      %p69 = scmp.eq.s32.totalorder %s17, 3
      %p70 = por %p68, %p69
      %p71 = scmp.ne.s32.totalorder %s62, %s63
      %p72 = scmp.eq.s32.totalorder %s17, 0
      %p73 = por %p71, %p72
      %p74 = scmp.ne.s32.totalorder %s62, %s63
      %p75 = scmp.eq.s32.totalorder %s18, 3
      %p76 = por %p74, %p75
      %p78 = scmp.ne.s32.totalorder %s63, %s77
      %p79 = scmp.eq.s32.totalorder %s18, 0
      %p80 = por %p78, %p79
      %s82 = sadd.s32 %s81, 1
      %p85 = scmp.eq.s32.totalorder %s12, 3
      %p86 = scmp.ne.s32.totalorder %s81, %s83
      %p87 = scmp.eq.s32.totalorder %s12, 0
      %p88 = por %p86, %p87
      %p89 = scmp.ne.s32.totalorder %s81, %s83
      %p90 = scmp.eq.s32.totalorder %s17, 3
      %p91 = por %p89, %p90
      %p92 = scmp.ne.s32.totalorder %s83, %s84
      %p93 = scmp.eq.s32.totalorder %s17, 0
      %p94 = por %p92, %p93
      %p95 = scmp.ne.s32.totalorder %s83, %s84
      %p96 = scmp.eq.s32.totalorder %s18, 3
      %p97 = por %p95, %p96
      %p99 = scmp.ne.s32.totalorder %s84, %s98
      %p100 = scmp.eq.s32.totalorder %s18, 0
      %p101 = por %p99, %p100
      %s102 = ssub.s32 %s19, %s31
      %s103 = ssub.s32 %s20, %s27
      %s104 = sor.u32 %s102, %s103
      %p105 = scmp.eq.s32.totalorder %s104, 0
      %s107 = sadd.s32 %s106, 1
      %s108 = scalar_select %p105, %s106, %s107
      %p111 = pneg %p105
      %p112 = scmp.eq.s32.totalorder %s12, 3
      %p113 = por %p111, %p112
      %p114 = scmp.ne.s32.totalorder %s106, %s109
      %p115 = scmp.eq.s32.totalorder %s12, 0
      %p116 = por %p114, %p115
      %p117 = scmp.ne.s32.totalorder %s106, %s109
      %p118 = scmp.eq.s32.totalorder %s17, 3
      %p119 = por %p117, %p118
      %p120 = scmp.ne.s32.totalorder %s109, %s110
      %p121 = scmp.eq.s32.totalorder %s17, 0
      %p122 = por %p120, %p121
      %p123 = scmp.ne.s32.totalorder %s109, %s110
      %p124 = scmp.eq.s32.totalorder %s18, 3
      %p125 = por %p123, %p124
      %p127 = scmp.ne.s32.totalorder %s110, %s126
      %p128 = scmp.eq.s32.totalorder %s18, 0
      %p129 = por %p127, %p128
      %p130 = scmp.le.s32.totalorder 1, %s12
      %p131 = scmp.lt.s32.totalorder %s12, 5
      %p132 = pnand %p130, %p131
      %p133 = pneg %p132
      // Predicated region
      $region9: #{tpu_custom_call.1} parent=5 // pred_check
        _
      $region10: #{tpu_custom_call.1} parent=5 // pred_check_branch
        %135 = sbr.rel (%p132) target = $region12
      $region11: #{tpu_custom_call.1} parent=5 // pred_region
        %s136 = ssub.s32 %s12, 1
        // Predicated region
        $region13: #{tpu_custom_call.1} parent=11 // pred_check
          %p137 = pneg %p73
        $region14: #{tpu_custom_call.1} parent=11 // pred_check_branch
          %139 = sbr.rel (%p137) target = $region16
        $region15: #{tpu_custom_call.1} parent=11 // pred_region
          _
        $region16: #{tpu_custom_call.1} parent=11 // pred_fallthru
          _
        // Predicated region
        $region17: #{tpu_custom_call.1} parent=11 // pred_check
          %p140 = pneg %p94
        $region18: #{tpu_custom_call.1} parent=11 // pred_check_branch
          %142 = sbr.rel (%p140) target = $region20
        $region19: #{tpu_custom_call.1} parent=11 // pred_region
          _
        $region20: #{tpu_custom_call.1} parent=11 // pred_fallthru
          _
      $region12: #{tpu_custom_call.1} parent=5 // pred_fallthru
        _
      %p143 = scmp.lt.s32.totalorder %s12, 4
      // Predicated region
      $region21: #{tpu_custom_call.1} parent=5 // pred_check
        %p144 = pneg %p143
      $region22: #{tpu_custom_call.1} parent=5 // pred_check_branch
        %146 = sbr.rel (%p144) target = $region24
      $region23: #{tpu_custom_call.1} parent=5 // pred_region
        // Predicated region
        $region25: #{tpu_custom_call.1} parent=23 // pred_check
          %p147 = pneg %p46
        $region26: #{tpu_custom_call.1} parent=23 // pred_check_branch
          %149 = sbr.rel (%p147) target = $region28
        $region27: #{tpu_custom_call.1} parent=23 // pred_region
          %p150 = scmp.lt.s32.totalorder %s19, 1
          %s151 = scalar_select %p150, %s19, 1
          %p152 = scmp.lt.s32.totalorder %s20, 1
          %s153 = scalar_select %p152, %s20, 1
          %s154 = smul.addr %s151, 2
          %s155 = sadd.s32 %s153, %s154
          %s156 = smul.addr %s155, 4
          %s157 = scalar_lea.vmem %s0, %s156
        $region28: #{tpu_custom_call.1} parent=23 // pred_fallthru
          _
      $region24: #{tpu_custom_call.1} parent=5 // pred_fallthru
        _
      %p158 = scmp.le.s32.totalorder 1, %s12
      %p159 = scmp.lt.s32.totalorder %s12, 5
      %p160 = pnand %p158, %p159
      %p161 = pneg %p160
      // Predicated region
      $region29: #{tpu_custom_call.1} parent=5 // pred_check
        _
      $region30: #{tpu_custom_call.1} parent=5 // pred_check_branch
        %163 = sbr.rel (%p160) target = $region32
      $region31: #{tpu_custom_call.1} parent=5 // pred_region
        %s164 = ssub.s32 %s12, 1
        %p165 = scmp.lt.s32.totalorder %s21, 1
        %s166 = scalar_select %p165, %s21, 1
        %p167 = scmp.lt.s32.totalorder %s22, 1
        %s168 = scalar_select %p167, %s22, 1
        %s169 = smul.addr %s166, 2
        %s170 = sadd.s32 %s168, %s169
        %s171 = smul.addr %s170, 4
        %s172 = scalar_lea.vmem %s0, %s171
        %p173 = pneg %p52
        %p174 = pneg %p49
        %p175 = pneg %p73
        %p176 = pneg %p70
        %p177 = pneg %p94
        %p178 = pneg %p91
        %p179 = pneg %p122
        %p180 = pneg %p119
        %s181 = sand.u32 %s109, 1
        %s182 = scalar_lea.sflag [#allocation3], %s181
        %s183 = sand.u32 %s109, 1
        %s184 = smul.addr %s183, 8
        %s185 = scalar_lea.vmem [#allocation2], %s184
        %p186 = scmp.lt.s32.totalorder %s21, 1
        %s187 = scalar_select %p186, %s21, 1
        %p188 = scmp.lt.s32.totalorder %s22, 1
        %s189 = scalar_select %p188, %s22, 1
        %s190 = smul.addr %s187, 2
        %s191 = sadd.s32 %s189, %s190
        %s192 = smul.addr %s191, 4
        %s193 = scalar_lea.vmem %s0, %s192
        %v194 = vld [vmem:[%s1] sm:$0xff]
        %v195 = vld [vmem:[%s193] sm:$0xf]
        %v196 = vld [vmem:[%s2] sm:$0xff]
        %198 = vset.pattern.permute.xlu0 0
        %199 = vperm.xlu0 %198, %v196
        %v200 = vpop.permute.xlu0 %199
        %vm202 = vcmask 31744
        %v204 = vsel %vm202, %v194, 0
        %vm206 = vcmask 1043456
        %v208 = vsel %vm206, %v195, 0
        %210 = vmatpush.msra.mxu0 0.0
        %211 = vmatpush.msra.mxu0 0.0
        %212 = vmatpush.msra.mxu0 0.0
        %213 = vmatpush.msra.mxu0 0.0
        %214 = vmatpush.msra.mxu0 0.0
        %215 = vmatpush.msra.mxu0 0.0
        %216 = vmatpush.msra.mxu0 0.0
        %217 = vmatpush.msra.mxu0 0.0
        %218 = vmatpush.msra.mxu0 0.0
        %219 = vmatpush.msra.mxu0 0.0
        %220 = vmatpush.msra.mxu0 0.0
        %221 = vmatpush.msra.mxu0 0.0
        %222 = vmatpush.msra.mxu0 0.0
        %223 = vmatpush.msra.mxu0 0.0
        %224 = vmatpush.msra.mxu0 0.0
        %225 = vmatpush.msra.mxu0 %v208
        %226 = vmatmul.f32.gmra.mxu0 %v204
        %v227 = vpop.f32.mrf.mxu0
        %v228 = vadd.f32 %v200, %v227
        %229 = vdwg.mxu0
        %230 = vst [vmem:[%s185] sm:$0xff] %v228
        %s231 = sand.u32 %s109, 1
        %s232 = scalar_lea.sflag [#allocation3], %s231
        %s233 = sand.u32 %s109, 1
        %s234 = smul.addr %s233, 8
        %s235 = scalar_lea.vmem [#allocation2], %s234
        // Predicated region
        $region33: #{tpu_custom_call.1} parent=31 // pred_check
          %p236 = pneg %p119
        $region34: #{tpu_custom_call.1} parent=31 // pred_check_branch
          %238 = sbr.rel (%p236) target = $region36
        $region35: #{tpu_custom_call.1} parent=31 // pred_region
          %240 = vsyncadd %s232, 0
          %s241 = smul.addr %s21, 2
          %s242 = sadd.s32 %s22, %s241
          %s243 = smul.addr %s242, 8
          %s244 = scalar_lea.hbm %s3, %s243
          %s246 = sshll.u32 %s235, 4
          %s247 = int_to_ptr.vmem [resolvable:$true] %s246
          %s248 = sshll.u32 %s244, 4
          %s249 = int_to_ptr.hbm [resolvable:$true] %s248
          %251 = dma.vmem_to_hbm [thread:$0]  %s247, 128, %s249, %s232
        $region36: #{tpu_custom_call.1} parent=31 // pred_fallthru
          _
      $region32: #{tpu_custom_call.1} parent=5 // pred_fallthru
        _
      %p252 = scmp.le.s32.totalorder 2, %s12
      // Predicated region
      $region37: #{tpu_custom_call.1} parent=5 // pred_check
        %p253 = pneg %p252
      $region38: #{tpu_custom_call.1} parent=5 // pred_check_branch
        %255 = sbr.rel (%p253) target = $region40
      $region39: #{tpu_custom_call.1} parent=5 // pred_region
        %s256 = ssub.s32 %s12, 2
        // Predicated region
        $region41: #{tpu_custom_call.1} parent=39 // pred_check
          %p257 = pneg %p125
        $region42: #{tpu_custom_call.1} parent=39 // pred_check_branch
          %259 = sbr.rel (%p257) target = $region44
        $region43: #{tpu_custom_call.1} parent=39 // pred_region
          %s260 = sand.u32 %s110, 1
          %s261 = scalar_lea.sflag [#allocation3], %s260
          %s262 = sand.u32 %s110, 1
          %s263 = smul.addr %s262, 8
          %s264 = scalar_lea.vmem [#allocation2], %s263
          %266 = dma.done %s261, 128
        $region44: #{tpu_custom_call.1} parent=39 // pred_fallthru
          _
      $region40: #{tpu_custom_call.1} parent=5 // pred_fallthru
        _
    $region6: #{tpu_custom_call.1} parent=1 // loop_footer
      %s16 = sadd.s32 1, %s12
    $region7: #{tpu_custom_call.1} parent=1 // loop_footer_branch
      %11 = sbr.rel target = $region3
    $region8: #{tpu_custom_call.1} parent=1 // loop_exit
      _
    %267 = vsyncpa [#allocation3], 1
    %s268 = scalar_lea.sflag [#allocation3], 1
    %269 = vsyncpa %s268, 1

</llo_original>
